<compile_context>
chip_gen: v6e
topology: v6e:2x2x1
jax: 0.10.0
libtpu: 0.0.40
codegen_flags: <defaults>
</compile_context>

<pallas_src>
import math
import functools

import jax
import jax.numpy as jnp
from jax.experimental import pallas as pl
from jax.experimental.pallas import tpu as pltpu


def _mha_kernel(x_ref, wqkv_ref, bqkv_ref, wo_ref, bo_ref, o_ref, *,
                batch_tile, seq_len, n_heads, d_k):
    """One batch tile of `batch_tile` independent sequences.

    x_ref    : (Bt, L, Din)   bf16  input tokens
    wqkv_ref : (Din, 3*pad)   bf16  fused [Q|K|V] weights (pre_proj and
                                    1/sqrt(d_k) folded in on the host)
    bqkv_ref : (1, 3*pad)     f32   fused [Q|K|V] biases (from pre_proj bias)
    wo_ref   : (pad, pad)     bf16  output projection
    bo_ref   : (1, pad)       f32
    o_ref    : (Bt, L, pad)   f32
    """
    Bt, L, H, dk = batch_tile, seq_len, n_heads, d_k
    T = Bt * L
    pad = H * dk
    din = x_ref.shape[-1]

    # Fold the batch tile into the matmul M dimension for the projections.
    x = x_ref[...].reshape(T, din)                               # (T, Din) bf16

    # Single fused QKV projection: one MXU op with N = 3*pad columns.
    qkv = jnp.dot(x, wqkv_ref[...],
                  preferred_element_type=jnp.float32) + bqkv_ref[...]  # (T, 3*pad) f32

    # Attention core: batch stays a leading einsum axis (no cross-batch
    # block-diagonal masking, no quadratic-in-Bt wasted exp/select work).
    # The per-head loop is over tiny (L, L) tiles only.
    ctx_heads = []
    for h in range(H):
        q_h = qkv[:, h * dk:(h + 1) * dk] \
            .reshape(Bt, L, dk).astype(jnp.bfloat16)
        k_h = qkv[:, pad + h * dk: pad + (h + 1) * dk] \
            .reshape(Bt, L, dk).astype(jnp.bfloat16)
        v_h = qkv[:, 2 * pad + h * dk: 2 * pad + (h + 1) * dk] \
            .reshape(Bt, L, dk).astype(jnp.bfloat16)

        # Scores (scale already folded into the Q weights), f32 accumulation.
        s = jnp.einsum("bqd,bkd->bqk", q_h, k_h,
                       preferred_element_type=jnp.float32)       # (Bt, L, L)
        s = s - jnp.max(s, axis=-1, keepdims=True)
        e = jnp.exp(s)
        attn = e * pl.reciprocal(jnp.sum(e, axis=-1, keepdims=True),
                                 approx=True)

        c = jnp.einsum("bqk,bkd->bqd", attn.astype(jnp.bfloat16), v_h,
                       preferred_element_type=jnp.float32)       # (Bt, L, dk)
        ctx_heads.append(c.reshape(T, dk))

    ctx = jnp.concatenate(ctx_heads, axis=-1)                    # (T, pad) f32

    # Output projection as a single full-width MXU matmul (contraction K=pad).
    out = jnp.dot(ctx.astype(jnp.bfloat16), wo_ref[...],
                  preferred_element_type=jnp.float32) + bo_ref[...]  # (T, pad)

    o_ref[...] = out.reshape(Bt, L, pad)


def _pick_batch_tile(batch, seq_len, *, max_tokens=1024, min_grid=2):
    """Largest divisor of `batch` keeping <= max_tokens tokens per grid step
    while leaving at least `min_grid` grid steps (feeds both v7x TensorCores
    through the `parallel` grid axis)."""
    bt = max(1, min(batch, max_tokens // max(seq_len, 1)))
    if batch >= min_grid:
        bt = min(bt, max(1, batch // min_grid))
    while batch % bt:
        bt -= 1
    return bt


def _vmem_limit_bytes(batch_tile, seq_len, din, pad, n_heads):
    """Rough per-step VMEM footprint with generous headroom, capped below the
    v7x 64 MiB physical budget (v5e/v6e have 128 MiB, so the cap is safe)."""
    T = batch_tile * seq_len
    bf, f4 = 2, 4
    io = 2 * T * din * bf + 2 * T * pad * f4                 # double-buffered x / out
    wts = 2 * (din * 3 * pad * bf + pad * pad * bf + 4 * pad * f4)
    inter = (T * 3 * pad * f4                                # qkv
             + 3 * T * pad * bf                              # q/k/v bf16 views
             + 3 * batch_tile * n_heads * seq_len * seq_len * f4   # s/e/attn
             + 2 * T * pad * f4)                             # ctx + out
    need = io + wts + inter
    return int(min(max(4 * need, 32 * 2 ** 20), 48 * 2 ** 20))


def multi_head_attention(x, params, *, n_heads, batch_tile=None):
    """x: (B, L, orig_d) float32.  params: dict of f32 weights (see init)."""
    B, L, orig_d = x.shape
    w_pre, b_pre = params["w_pre"], params["b_pre"]    # (orig_d, pad), (1, pad)
    w_q, w_k, w_v = params["w_q"], params["w_k"], params["w_v"]   # (pad, pad)
    w_o, b_o = params["w_o"], params["b_o"]            # (pad, pad), (1, pad)
    pad = w_q.shape[0]
    d_k = pad // n_heads
    scale = 1.0 / math.sqrt(d_k)

    if batch_tile is None:
        batch_tile = _pick_batch_tile(B, L)
    assert B % batch_tile == 0, "batch_tile must divide the batch size"

    # ---- host-side (f32) weight preprocessing: fold pre_proj + scale, fuse
    # ---- Q|K|V into one weight matrix, cast matmul operands to bf16.
    w_qkv = jnp.concatenate(
        [(w_pre @ w_q) * scale, w_pre @ w_k, w_pre @ w_v], axis=1
    ).astype(jnp.bfloat16)                                   # (orig_d, 3*pad)
    b_qkv = jnp.concatenate(
        [(b_pre @ w_q) * scale, b_pre @ w_k, b_pre @ w_v], axis=1
    ).astype(jnp.float32)                                    # (1, 3*pad)
    w_o_bf = w_o.astype(jnp.bfloat16)                        # (pad, pad)
    b_o_f = b_o.reshape(1, pad).astype(jnp.float32)          # (1, pad)

    x_bf16 = x.astype(jnp.bfloat16)

    kernel = functools.partial(_mha_kernel, batch_tile=batch_tile,
                               seq_len=L, n_heads=n_heads, d_k=d_k)

    full = lambda shape: pl.BlockSpec(shape, lambda b, s=len(shape): (0,) * s)

    out = pl.pallas_call(
        kernel,
        out_shape=jax.ShapeDtypeStruct((B, L, pad), jnp.float32),
        grid=(B // batch_tile,),
        in_specs=[
            pl.BlockSpec((batch_tile, L, orig_d), lambda b: (b, 0, 0)),  # x
            full((orig_d, 3 * pad)),   # fused W_qkv (pre_proj + scale folded)
            full((1, 3 * pad)),        # fused b_qkv
            full((pad, pad)),          # W_o
            full((1, pad)),            # b_o
        ],
        out_specs=pl.BlockSpec((batch_tile, L, pad), lambda b: (b, 0, 0)),
        compiler_params=pltpu.CompilerParams(
            dimension_semantics=("parallel",),
            vmem_limit_bytes=_vmem_limit_bytes(batch_tile, L, orig_d, pad,
                                               n_heads)),
    )(x_bf16, w_qkv, b_qkv, w_o_bf, b_o_f)

    # Pad-wide kernel output; drop the padding channels in the wrapper.
    return out[..., :orig_d]


def init_params(key, d_model, n_heads):
    """Deterministic synthetic weights, shapes implied by the module __init__."""
    pad_to = math.ceil(d_model / n_heads) * n_heads
    ks = jax.random.split(key, 7)
    s = 0.1
    if pad_to != d_model:
        w_pre = s * jax.random.normal(ks[0], (d_model, pad_to), jnp.float32)
        b_pre = s * jax.random.normal(ks[1], (1, pad_to), jnp.float32)
    else:
        w_pre = jnp.eye(d_model, dtype=jnp.float32)
        b_pre = jnp.zeros((1, pad_to), jnp.float32)
    return {
        "w_pre": w_pre,
        "b_pre": b_pre,
        "w_q": s * jax.random.normal(ks[2], (pad_to, pad_to), jnp.float32),
        "w_k": s * jax.random.normal(ks[3], (pad_to, pad_to), jnp.float32),
        "w_v": s * jax.random.normal(ks[4], (pad_to, pad_to), jnp.float32),
        "w_o": s * jax.random.normal(ks[5], (pad_to, pad_to), jnp.float32),
        "b_o": s * jax.random.normal(ks[6], (1, pad_to), jnp.float32),
    }


def reference_mha(x, params, *, n_heads):
    """Pure-JAX f32 reference mirroring the PyTorch forward (eval mode)."""
    B, L, orig_d = x.shape
    pad_to = params["w_q"].shape[0]
    d_k = pad_to // n_heads
    xp = x @ params["w_pre"] + params["b_pre"]
    q = (xp @ params["w_q"]).reshape(B, L, n_heads, d_k).transpose(0, 2, 1, 3)
    k = (xp @ params["w_k"]).reshape(B, L, n_heads, d_k).transpose(0, 2, 1, 3)
    v = (xp @ params["w_v"]).reshape(B, L, n_heads, d_k).transpose(0, 2, 1, 3)
    scores = jnp.einsum("bhqd,bhkd->bhqk", q, k) / math.sqrt(d_k)
    attn = jax.nn.softmax(scores, axis=-1)
    ctx = jnp.einsum("bhqk,bhkd->bhqd", attn, v)
    ctx = ctx.transpose(0, 2, 1, 3).reshape(B, L, pad_to)
    out = ctx @ params["w_o"] + params["b_o"]
    return out[..., :orig_d]


if __name__ == "__main__":
    # Small shapes consistent with the module: batch=2, seq=8, d_model=30.
    # d_model=30 with n_heads=4 exercises the padding path (pad_to=32, d_k=8),
    # and batch=2 produces grid=(2,) so both v7x TensorCores get a step.
    B, L, D_MODEL, N_HEADS = 2, 8, 30, 4

    key = jax.random.PRNGKey(0)
    kx, kp = jax.random.split(key)
    x = jax.random.normal(kx, (B, L, D_MODEL), jnp.float32)
    params = init_params(kp, D_MODEL, N_HEADS)

    out = multi_head_attention(x, params, n_heads=N_HEADS)
    out = jax.block_until_ready(out)

    ref = reference_mha(x, params, n_heads=N_HEADS)
    assert out.shape == (B, L, D_MODEL)
    max_err = float(jnp.max(jnp.abs(out - ref)))
    # bf16 matmul operands (f32 accumulation) -> relaxed tolerance vs f32 ref.
    assert jnp.allclose(out, ref, atol=2e-2, rtol=2e-2), (
        f"mismatch vs reference, max abs err = {max_err}")

    print("KERNEL_OK")
</pallas_src>

<mosaic_0001>
module attributes {stable_mosaic.version = 11 : i64} {
  func.func @_mha_kernel(%arg0: i32, %arg1: memref<1x8x30xbf16, #tpu.memory_space<vmem>>, %arg2: memref<30x96xbf16, #tpu.memory_space<vmem>>, %arg3: memref<1x96xf32, #tpu.memory_space<vmem>>, %arg4: memref<32x32xbf16, #tpu.memory_space<vmem>>, %arg5: memref<1x32xf32, #tpu.memory_space<vmem>>, %arg6: memref<1x8x32xf32, #tpu.memory_space<vmem>>) attributes {dimension_semantics = [#tpu.dimension_semantics<parallel>], iteration_bounds = array<i64: 2>, scalar_prefetch = 0 : i64, scratch_operands = 0 : i64, tpu.core_type = #tpu.core_type<tc>, window_params = [{transform_indices = @transform_0, window_bounds = array<i64: 1, 8, 30>}, {pipeline_mode = #tpu.pipeline_mode<synchronous>, transform_indices = @transform_1, window_bounds = array<i64: 30, 96>}, {pipeline_mode = #tpu.pipeline_mode<synchronous>, transform_indices = @transform_2, window_bounds = array<i64: 1, 96>}, {pipeline_mode = #tpu.pipeline_mode<synchronous>, transform_indices = @transform_3, window_bounds = array<i64: 32, 32>}, {pipeline_mode = #tpu.pipeline_mode<synchronous>, transform_indices = @transform_4, window_bounds = array<i64: 1, 32>}, {transform_indices = @transform_5, window_bounds = array<i64: 1, 8, 32>}]} {
    %c0 = arith.constant 0 : index
    %c0_0 = arith.constant 0 : index
    %c0_1 = arith.constant 0 : index
    %0 = vector.load %arg1[%c0, %c0_0, %c0_1] : memref<1x8x30xbf16, #tpu.memory_space<vmem>>, vector<1x8x30xbf16>
    %1 = vector.shape_cast %0 : vector<1x8x30xbf16> to vector<8x30xbf16>
    %c0_2 = arith.constant 0 : index
    %c0_3 = arith.constant 0 : index
    %2 = vector.load %arg2[%c0_2, %c0_3] : memref<30x96xbf16, #tpu.memory_space<vmem>>, vector<30x96xbf16>
    %cst = arith.constant dense<0.000000e+00> : vector<8x96xf32>
    %3 = tpu.matmul %1, %2, %cst {dimension_numbers = #tpu.dot_dimension_numbers<[1], [0], [0], [1], [0, 0, 1, 1], [], []>} : vector<8x30xbf16>, vector<30x96xbf16>, vector<8x96xf32> -> vector<8x96xf32>
    %c0_4 = arith.constant 0 : index
    %c0_5 = arith.constant 0 : index
    %4 = vector.load %arg3[%c0_4, %c0_5] : memref<1x96xf32, #tpu.memory_space<vmem>>, vector<1x96xf32>
    %5 = vector.broadcast %4 : vector<1x96xf32> to vector<8x96xf32>
    %6 = arith.addf %3, %5 : vector<8x96xf32>
    %7 = vector.extract_strided_slice %6 {offsets = [0, 0], sizes = [8, 8], strides = [1, 1]} : vector<8x96xf32> to vector<8x8xf32>
    %8 = vector.shape_cast %7 : vector<8x8xf32> to vector<1x8x8xf32>
    %9 = arith.truncf %8 : vector<1x8x8xf32> to vector<1x8x8xbf16>
    %10 = vector.extract_strided_slice %6 {offsets = [0, 32], sizes = [8, 8], strides = [1, 1]} : vector<8x96xf32> to vector<8x8xf32>
    %11 = vector.shape_cast %10 : vector<8x8xf32> to vector<1x8x8xf32>
    %12 = arith.truncf %11 : vector<1x8x8xf32> to vector<1x8x8xbf16>
    %13 = vector.extract_strided_slice %6 {offsets = [0, 64], sizes = [8, 8], strides = [1, 1]} : vector<8x96xf32> to vector<8x8xf32>
    %14 = vector.shape_cast %13 : vector<8x8xf32> to vector<1x8x8xf32>
    %15 = arith.truncf %14 : vector<1x8x8xf32> to vector<1x8x8xbf16>
    "tpu.trace_start"() <{level = 10 : i32, message = "bqd,bkd->bqk"}> : () -> ()
    %cst_6 = arith.constant dense<0.000000e+00> : vector<1x8x8xf32>
    %16 = tpu.matmul %9, %12, %cst_6 {dimension_numbers = #tpu.dot_dimension_numbers<[2], [2], [1], [1], [0, 0, 0, 1, 1, 1], [0], [0]>} : vector<1x8x8xbf16>, vector<1x8x8xbf16>, vector<1x8x8xf32> -> vector<1x8x8xf32>
    "tpu.trace_stop"() : () -> ()
    %cst_7 = arith.constant dense<0xFF800000> : vector<1x8xf32>
    %17 = vector.multi_reduction <maximumf>, %16, %cst_7 [2] : vector<1x8x8xf32> to vector<1x8xf32>
    %18 = vector.shape_cast %17 : vector<1x8xf32> to vector<1x8x1xf32>
    %19 = vector.broadcast %18 : vector<1x8x1xf32> to vector<1x8x8xf32>
    %20 = arith.subf %16, %19 : vector<1x8x8xf32>
    %21 = math.exp %20 : vector<1x8x8xf32>
    %cst_8 = arith.constant dense<0.000000e+00> : vector<1x8xf32>
    %22 = vector.multi_reduction <add>, %21, %cst_8 [2] : vector<1x8x8xf32> to vector<1x8xf32>
    %23 = vector.shape_cast %22 : vector<1x8xf32> to vector<1x8x1xf32>
    %24 = tpu.reciprocal %23 {approx = true} : vector<1x8x1xf32> -> vector<1x8x1xf32>
    %25 = vector.broadcast %24 : vector<1x8x1xf32> to vector<1x8x8xf32>
    %26 = arith.mulf %21, %25 : vector<1x8x8xf32>
    %27 = arith.truncf %26 : vector<1x8x8xf32> to vector<1x8x8xbf16>
    "tpu.trace_start"() <{level = 10 : i32, message = "bqk,bkd->bqd"}> : () -> ()
    %cst_9 = arith.constant dense<0.000000e+00> : vector<1x8x8xf32>
    %28 = tpu.matmul %27, %15, %cst_9 {dimension_numbers = #tpu.dot_dimension_numbers<[2], [1], [1], [2], [0, 0, 0, 1, 1, 2], [0], [0]>} : vector<1x8x8xbf16>, vector<1x8x8xbf16>, vector<1x8x8xf32> -> vector<1x8x8xf32>
    "tpu.trace_stop"() : () -> ()
    %29 = vector.shape_cast %28 : vector<1x8x8xf32> to vector<8x8xf32>
    %30 = vector.extract_strided_slice %6 {offsets = [0, 8], sizes = [8, 8], strides = [1, 1]} : vector<8x96xf32> to vector<8x8xf32>
    %31 = vector.shape_cast %30 : vector<8x8xf32> to vector<1x8x8xf32>
    %32 = arith.truncf %31 : vector<1x8x8xf32> to vector<1x8x8xbf16>
    %33 = vector.extract_strided_slice %6 {offsets = [0, 40], sizes = [8, 8], strides = [1, 1]} : vector<8x96xf32> to vector<8x8xf32>
    %34 = vector.shape_cast %33 : vector<8x8xf32> to vector<1x8x8xf32>
    %35 = arith.truncf %34 : vector<1x8x8xf32> to vector<1x8x8xbf16>
    %36 = vector.extract_strided_slice %6 {offsets = [0, 72], sizes = [8, 8], strides = [1, 1]} : vector<8x96xf32> to vector<8x8xf32>
    %37 = vector.shape_cast %36 : vector<8x8xf32> to vector<1x8x8xf32>
    %38 = arith.truncf %37 : vector<1x8x8xf32> to vector<1x8x8xbf16>
    "tpu.trace_start"() <{level = 10 : i32, message = "bqd,bkd->bqk"}> : () -> ()
    %cst_10 = arith.constant dense<0.000000e+00> : vector<1x8x8xf32>
    %39 = tpu.matmul %32, %35, %cst_10 {dimension_numbers = #tpu.dot_dimension_numbers<[2], [2], [1], [1], [0, 0, 0, 1, 1, 1], [0], [0]>} : vector<1x8x8xbf16>, vector<1x8x8xbf16>, vector<1x8x8xf32> -> vector<1x8x8xf32>
    "tpu.trace_stop"() : () -> ()
    %cst_11 = arith.constant dense<0xFF800000> : vector<1x8xf32>
    %40 = vector.multi_reduction <maximumf>, %39, %cst_11 [2] : vector<1x8x8xf32> to vector<1x8xf32>
    %41 = vector.shape_cast %40 : vector<1x8xf32> to vector<1x8x1xf32>
    %42 = vector.broadcast %41 : vector<1x8x1xf32> to vector<1x8x8xf32>
    %43 = arith.subf %39, %42 : vector<1x8x8xf32>
    %44 = math.exp %43 : vector<1x8x8xf32>
    %cst_12 = arith.constant dense<0.000000e+00> : vector<1x8xf32>
    %45 = vector.multi_reduction <add>, %44, %cst_12 [2] : vector<1x8x8xf32> to vector<1x8xf32>
    %46 = vector.shape_cast %45 : vector<1x8xf32> to vector<1x8x1xf32>
    %47 = tpu.reciprocal %46 {approx = true} : vector<1x8x1xf32> -> vector<1x8x1xf32>
    %48 = vector.broadcast %47 : vector<1x8x1xf32> to vector<1x8x8xf32>
    %49 = arith.mulf %44, %48 : vector<1x8x8xf32>
    %50 = arith.truncf %49 : vector<1x8x8xf32> to vector<1x8x8xbf16>
    "tpu.trace_start"() <{level = 10 : i32, message = "bqk,bkd->bqd"}> : () -> ()
    %cst_13 = arith.constant dense<0.000000e+00> : vector<1x8x8xf32>
    %51 = tpu.matmul %50, %38, %cst_13 {dimension_numbers = #tpu.dot_dimension_numbers<[2], [1], [1], [2], [0, 0, 0, 1, 1, 2], [0], [0]>} : vector<1x8x8xbf16>, vector<1x8x8xbf16>, vector<1x8x8xf32> -> vector<1x8x8xf32>
    "tpu.trace_stop"() : () -> ()
    %52 = vector.shape_cast %51 : vector<1x8x8xf32> to vector<8x8xf32>
    %53 = vector.extract_strided_slice %6 {offsets = [0, 16], sizes = [8, 8], strides = [1, 1]} : vector<8x96xf32> to vector<8x8xf32>
    %54 = vector.shape_cast %53 : vector<8x8xf32> to vector<1x8x8xf32>
    %55 = arith.truncf %54 : vector<1x8x8xf32> to vector<1x8x8xbf16>
    %56 = vector.extract_strided_slice %6 {offsets = [0, 48], sizes = [8, 8], strides = [1, 1]} : vector<8x96xf32> to vector<8x8xf32>
    %57 = vector.shape_cast %56 : vector<8x8xf32> to vector<1x8x8xf32>
    %58 = arith.truncf %57 : vector<1x8x8xf32> to vector<1x8x8xbf16>
    %59 = vector.extract_strided_slice %6 {offsets = [0, 80], sizes = [8, 8], strides = [1, 1]} : vector<8x96xf32> to vector<8x8xf32>
    %60 = vector.shape_cast %59 : vector<8x8xf32> to vector<1x8x8xf32>
    %61 = arith.truncf %60 : vector<1x8x8xf32> to vector<1x8x8xbf16>
    "tpu.trace_start"() <{level = 10 : i32, message = "bqd,bkd->bqk"}> : () -> ()
    %cst_14 = arith.constant dense<0.000000e+00> : vector<1x8x8xf32>
    %62 = tpu.matmul %55, %58, %cst_14 {dimension_numbers = #tpu.dot_dimension_numbers<[2], [2], [1], [1], [0, 0, 0, 1, 1, 1], [0], [0]>} : vector<1x8x8xbf16>, vector<1x8x8xbf16>, vector<1x8x8xf32> -> vector<1x8x8xf32>
    "tpu.trace_stop"() : () -> ()
    %cst_15 = arith.constant dense<0xFF800000> : vector<1x8xf32>
    %63 = vector.multi_reduction <maximumf>, %62, %cst_15 [2] : vector<1x8x8xf32> to vector<1x8xf32>
    %64 = vector.shape_cast %63 : vector<1x8xf32> to vector<1x8x1xf32>
    %65 = vector.broadcast %64 : vector<1x8x1xf32> to vector<1x8x8xf32>
    %66 = arith.subf %62, %65 : vector<1x8x8xf32>
    %67 = math.exp %66 : vector<1x8x8xf32>
    %cst_16 = arith.constant dense<0.000000e+00> : vector<1x8xf32>
    %68 = vector.multi_reduction <add>, %67, %cst_16 [2] : vector<1x8x8xf32> to vector<1x8xf32>
    %69 = vector.shape_cast %68 : vector<1x8xf32> to vector<1x8x1xf32>
    %70 = tpu.reciprocal %69 {approx = true} : vector<1x8x1xf32> -> vector<1x8x1xf32>
    %71 = vector.broadcast %70 : vector<1x8x1xf32> to vector<1x8x8xf32>
    %72 = arith.mulf %67, %71 : vector<1x8x8xf32>
    %73 = arith.truncf %72 : vector<1x8x8xf32> to vector<1x8x8xbf16>
    "tpu.trace_start"() <{level = 10 : i32, message = "bqk,bkd->bqd"}> : () -> ()
    %cst_17 = arith.constant dense<0.000000e+00> : vector<1x8x8xf32>
    %74 = tpu.matmul %73, %61, %cst_17 {dimension_numbers = #tpu.dot_dimension_numbers<[2], [1], [1], [2], [0, 0, 0, 1, 1, 2], [0], [0]>} : vector<1x8x8xbf16>, vector<1x8x8xbf16>, vector<1x8x8xf32> -> vector<1x8x8xf32>
    "tpu.trace_stop"() : () -> ()
    %75 = vector.shape_cast %74 : vector<1x8x8xf32> to vector<8x8xf32>
    %76 = vector.extract_strided_slice %6 {offsets = [0, 24], sizes = [8, 8], strides = [1, 1]} : vector<8x96xf32> to vector<8x8xf32>
    %77 = vector.shape_cast %76 : vector<8x8xf32> to vector<1x8x8xf32>
    %78 = arith.truncf %77 : vector<1x8x8xf32> to vector<1x8x8xbf16>
    %79 = vector.extract_strided_slice %6 {offsets = [0, 56], sizes = [8, 8], strides = [1, 1]} : vector<8x96xf32> to vector<8x8xf32>
    %80 = vector.shape_cast %79 : vector<8x8xf32> to vector<1x8x8xf32>
    %81 = arith.truncf %80 : vector<1x8x8xf32> to vector<1x8x8xbf16>
    %82 = vector.extract_strided_slice %6 {offsets = [0, 88], sizes = [8, 8], strides = [1, 1]} : vector<8x96xf32> to vector<8x8xf32>
    %83 = vector.shape_cast %82 : vector<8x8xf32> to vector<1x8x8xf32>
    %84 = arith.truncf %83 : vector<1x8x8xf32> to vector<1x8x8xbf16>
    "tpu.trace_start"() <{level = 10 : i32, message = "bqd,bkd->bqk"}> : () -> ()
    %cst_18 = arith.constant dense<0.000000e+00> : vector<1x8x8xf32>
    %85 = tpu.matmul %78, %81, %cst_18 {dimension_numbers = #tpu.dot_dimension_numbers<[2], [2], [1], [1], [0, 0, 0, 1, 1, 1], [0], [0]>} : vector<1x8x8xbf16>, vector<1x8x8xbf16>, vector<1x8x8xf32> -> vector<1x8x8xf32>
    "tpu.trace_stop"() : () -> ()
    %cst_19 = arith.constant dense<0xFF800000> : vector<1x8xf32>
    %86 = vector.multi_reduction <maximumf>, %85, %cst_19 [2] : vector<1x8x8xf32> to vector<1x8xf32>
    %87 = vector.shape_cast %86 : vector<1x8xf32> to vector<1x8x1xf32>
    %88 = vector.broadcast %87 : vector<1x8x1xf32> to vector<1x8x8xf32>
    %89 = arith.subf %85, %88 : vector<1x8x8xf32>
    %90 = math.exp %89 : vector<1x8x8xf32>
    %cst_20 = arith.constant dense<0.000000e+00> : vector<1x8xf32>
    %91 = vector.multi_reduction <add>, %90, %cst_20 [2] : vector<1x8x8xf32> to vector<1x8xf32>
    %92 = vector.shape_cast %91 : vector<1x8xf32> to vector<1x8x1xf32>
    %93 = tpu.reciprocal %92 {approx = true} : vector<1x8x1xf32> -> vector<1x8x1xf32>
    %94 = vector.broadcast %93 : vector<1x8x1xf32> to vector<1x8x8xf32>
    %95 = arith.mulf %90, %94 : vector<1x8x8xf32>
    %96 = arith.truncf %95 : vector<1x8x8xf32> to vector<1x8x8xbf16>
    "tpu.trace_start"() <{level = 10 : i32, message = "bqk,bkd->bqd"}> : () -> ()
    %cst_21 = arith.constant dense<0.000000e+00> : vector<1x8x8xf32>
    %97 = tpu.matmul %96, %84, %cst_21 {dimension_numbers = #tpu.dot_dimension_numbers<[2], [1], [1], [2], [0, 0, 0, 1, 1, 2], [0], [0]>} : vector<1x8x8xbf16>, vector<1x8x8xbf16>, vector<1x8x8xf32> -> vector<1x8x8xf32>
    "tpu.trace_stop"() : () -> ()
    %98 = vector.shape_cast %97 : vector<1x8x8xf32> to vector<8x8xf32>
    %99 = tpu.concatenate %29, %52, %75, %98 in 1 : vector<8x8xf32>, vector<8x8xf32>, vector<8x8xf32>, vector<8x8xf32> -> vector<8x32xf32>
    %100 = arith.truncf %99 : vector<8x32xf32> to vector<8x32xbf16>
    %c0_22 = arith.constant 0 : index
    %c0_23 = arith.constant 0 : index
    %101 = vector.load %arg4[%c0_22, %c0_23] : memref<32x32xbf16, #tpu.memory_space<vmem>>, vector<32x32xbf16>
    %cst_24 = arith.constant dense<0.000000e+00> : vector<8x32xf32>
    %102 = tpu.matmul %100, %101, %cst_24 {dimension_numbers = #tpu.dot_dimension_numbers<[1], [0], [0], [1], [0, 0, 1, 1], [], []>} : vector<8x32xbf16>, vector<32x32xbf16>, vector<8x32xf32> -> vector<8x32xf32>
    %c0_25 = arith.constant 0 : index
    %c0_26 = arith.constant 0 : index
    %103 = vector.load %arg5[%c0_25, %c0_26] : memref<1x32xf32, #tpu.memory_space<vmem>>, vector<1x32xf32>
    %104 = vector.broadcast %103 : vector<1x32xf32> to vector<8x32xf32>
    %105 = arith.addf %102, %104 : vector<8x32xf32>
    %106 = vector.shape_cast %105 : vector<8x32xf32> to vector<1x8x32xf32>
    %c0_27 = arith.constant 0 : index
    %c0_28 = arith.constant 0 : index
    %c0_29 = arith.constant 0 : index
    %107 = vector.load %arg6[%c0_27, %c0_28, %c0_29] : memref<1x8x32xf32, #tpu.memory_space<vmem>>, vector<1x8x32xf32>
    tpu.vector_store %arg6[%c0_27, %c0_28, %c0_29], %106 {strides = array<i32>} : memref<1x8x32xf32, #tpu.memory_space<vmem>>, vector<1x8x32xf32>,
    return
  }
  func.func @transform_0(%arg0: i32) -> (i32, i32, i32) {
    %c0_i32 = arith.constant 0 : i32
    %c0_i32_0 = arith.constant 0 : i32
    %c0_i32_1 = arith.constant 0 : i32
    return %arg0, %c0_i32, %c0_i32_0 : i32, i32, i32
  }
  func.func @transform_1(%arg0: i32) -> (i32, i32) {
    %c0_i32 = arith.constant 0 : i32
    %c0_i32_0 = arith.constant 0 : i32
    %c0_i32_1 = arith.constant 0 : i32
    return %c0_i32, %c0_i32_0 : i32, i32
  }
  func.func @transform_2(%arg0: i32) -> (i32, i32) {
    %c0_i32 = arith.constant 0 : i32
    %c0_i32_0 = arith.constant 0 : i32
    %c0_i32_1 = arith.constant 0 : i32
    return %c0_i32, %c0_i32_0 : i32, i32
  }
  func.func @transform_3(%arg0: i32) -> (i32, i32) {
    %c0_i32 = arith.constant 0 : i32
    %c0_i32_0 = arith.constant 0 : i32
    %c0_i32_1 = arith.constant 0 : i32
    return %c0_i32, %c0_i32_0 : i32, i32
  }
  func.func @transform_4(%arg0: i32) -> (i32, i32) {
    %c0_i32 = arith.constant 0 : i32
    %c0_i32_0 = arith.constant 0 : i32
    %c0_i32_1 = arith.constant 0 : i32
    return %c0_i32, %c0_i32_0 : i32, i32
  }
  func.func @transform_5(%arg0: i32) -> (i32, i32, i32) {
    %c0_i32 = arith.constant 0 : i32
    %c0_i32_0 = arith.constant 0 : i32
    %c0_i32_1 = arith.constant 0 : i32
    return %arg0, %c0_i32, %c0_i32_0 : i32, i32, i32
  }
}

</mosaic_0001>

<llo_original>
// kernel: tpu_custom_call.1
$region0: #{tpu_custom_call.1}
  #allocation0 [shape = 'u32[]', space=smem, size = 0x4, offset = 0x4, fixed_abs, tag = 'smem constant byte address 0x4 - core index']
  #allocation1 [shape = 'u32[144,128]{1,0:T(1,128)}', space=vmem, size = 0x12000, scoped, tag = 'internal scratch']
  %s0 = inlined_call_operand.hbm [shape: bf16[2,8,30], index: 0, kind: input, shape index: {}]
  %s1 = inlined_call_operand.hbm [shape: bf16[30,96], index: 1, kind: input, shape index: {}]
  %s2 = inlined_call_operand.vmem [shape: f32[1,96], index: 2, kind: input, shape index: {}]
  %s3 = inlined_call_operand.hbm [shape: bf16[32,32], index: 3, kind: input, shape index: {}]
  %s4 = inlined_call_operand.vmem [shape: f32[1,32], index: 4, kind: input, shape index: {}]
  %s5 = inlined_call_operand.hbm [shape: f32[2,8,32], index: 5, kind: output, shape index: {}]
  %s6 = sld [smem:[#allocation0]]
  $region65: #{tpu_custom_call.1} parent=0
    _
  %s8 = ssub.s32 1, %s6
  %s9 = scalar_select 0, %s8, %s6
  $region1: #{tpu_custom_call.1} parent=0
    #allocation2 [shape = 'u8[4096]{0}', space=vmem, size = 0x1000, scoped, tag = 'input window, operand 0']
    #allocation3 [shape = 's32[2]{0}', space=sflag, size = 0x8, scoped, tag = 'scoped memory for tpu_custom_call.1']
    #allocation4 [shape = 's32[2]{0}', space=sflag, size = 0x8, scoped, tag = 'scoped memory for tpu_custom_call.1']
    #allocation5 [shape = 'u8[8192]{0}', space=vmem, size = 0x2000, scoped, tag = 'input window, operand 1, single buffered']
    #allocation6 [shape = 's32[1]{0}', space=sflag, size = 0x4, scoped, tag = 'scoped memory for tpu_custom_call.1']
    #allocation7 [shape = 'u8[8192]{0}', space=vmem, size = 0x2000, scoped, tag = 'input window, operand 3, single buffered']
    #allocation8 [shape = 'u8[8192]{0}', space=vmem, size = 0x2000, scoped, tag = 'output window, operand 0']
    %10 = vsyncpa [#allocation3], 0
    %s11 = scalar_lea.sflag [#allocation3], 1
    %12 = vsyncpa %s11, 0
    %13 = vsyncpa [#allocation6], 0
    %14 = vsyncpa [#allocation4], 0
    %s15 = scalar_lea.sflag [#allocation4], 1
    %16 = vsyncpa %s15, 0
    loop: start=0, step=1, limit=4
    $region2: #{tpu_custom_call.1} parent=1 // loop_pre_header
      _
    $region3: #{tpu_custom_call.1} parent=1 // loop_header
      %s18 = sphi 0, %s22
      %p19 = scmp.ge.s32.totalorder %s18, 4
      %s28 = sphi 0, %s30
      %s31 = sphi 0, %s28
      %s32 = sphi 0, %s31
      %s48 = sphi 0, %s32
      %s52 = sphi 0, %s52
      %s54 = sphi 0, %s52
      %s55 = sphi 0, %s54
      %s69 = sphi 0, %s55
      %s73 = sphi 0, %s73
      %s75 = sphi 0, %s73
      %s76 = sphi 0, %s75
      %s90 = sphi 0, %s76
      %s94 = sphi 0, %s94
      %s96 = sphi 0, %s94
      %s97 = sphi 0, %s96
      %s111 = sphi 0, %s97
      %s115 = sphi 0, %s115
      %s117 = sphi 0, %s115
      %s118 = sphi 0, %s117
      %s132 = sphi 0, %s118
      %s138 = sphi 0, %s140
      %s141 = sphi 0, %s138
      %s142 = sphi 0, %s141
      %s158 = sphi 0, %s142
    $region4: #{tpu_custom_call.1} parent=1 // loop_header_branch
      %21 = sbr.rel (%p19) target = $region8
    $region5: #{tpu_custom_call.1} parent=1 // loop_body
      %s23 = ssub.s32 %s18, 1
      %s24 = ssub.s32 %s18, 2
      %s25 = sadd.s32 %s18, 1
      %s26 = ssub.s32 %s18, %s25
      %p27 = scmp.eq.s32.totalorder %s26, 0
      %s29 = sadd.s32 %s28, 1
      %s30 = scalar_select %p27, %s28, %s29
      %p33 = pneg %p27
      %p34 = scmp.eq.s32.totalorder %s18, 1
      %p35 = por %p33, %p34
      %p36 = scmp.ne.s32.totalorder %s28, %s31
      %p37 = scmp.eq.s32.totalorder %s18, 0
      %p38 = por %p36, %p37
      %p39 = scmp.ne.s32.totalorder %s28, %s31
      %p40 = scmp.eq.s32.totalorder %s23, 1
      %p41 = por %p39, %p40
      %p42 = scmp.ne.s32.totalorder %s31, %s32
      %p43 = scmp.eq.s32.totalorder %s23, 0
      %p44 = por %p42, %p43
      %p45 = scmp.ne.s32.totalorder %s31, %s32
      %p46 = scmp.eq.s32.totalorder %s24, 1
      %p47 = por %p45, %p46
      %p49 = scmp.ne.s32.totalorder %s32, %s48
      %p50 = scmp.eq.s32.totalorder %s24, 0
      %p51 = por %p49, %p50
      %s53 = sadd.s32 %s52, 1
      %p56 = scmp.eq.s32.totalorder %s18, 1
      %p57 = scmp.ne.s32.totalorder %s52, %s54
      %p58 = scmp.eq.s32.totalorder %s18, 0
      %p59 = por %p57, %p58
      %p60 = scmp.ne.s32.totalorder %s52, %s54
      %p61 = scmp.eq.s32.totalorder %s23, 1
      %p62 = por %p60, %p61
      %p63 = scmp.ne.s32.totalorder %s54, %s55
      %p64 = scmp.eq.s32.totalorder %s23, 0
      %p65 = por %p63, %p64
      %p66 = scmp.ne.s32.totalorder %s54, %s55
      %p67 = scmp.eq.s32.totalorder %s24, 1
      %p68 = por %p66, %p67
      %p70 = scmp.ne.s32.totalorder %s55, %s69
      %p71 = scmp.eq.s32.totalorder %s24, 0
      %p72 = por %p70, %p71
      %s74 = sadd.s32 %s73, 1
      %p77 = scmp.eq.s32.totalorder %s18, 1
      %p78 = scmp.ne.s32.totalorder %s73, %s75
      %p79 = scmp.eq.s32.totalorder %s18, 0
      %p80 = por %p78, %p79
      %p81 = scmp.ne.s32.totalorder %s73, %s75
      %p82 = scmp.eq.s32.totalorder %s23, 1
      %p83 = por %p81, %p82
      %p84 = scmp.ne.s32.totalorder %s75, %s76
      %p85 = scmp.eq.s32.totalorder %s23, 0
      %p86 = por %p84, %p85
      %p87 = scmp.ne.s32.totalorder %s75, %s76
      %p88 = scmp.eq.s32.totalorder %s24, 1
      %p89 = por %p87, %p88
      %p91 = scmp.ne.s32.totalorder %s76, %s90
      %p92 = scmp.eq.s32.totalorder %s24, 0
      %p93 = por %p91, %p92
      %s95 = sadd.s32 %s94, 1
      %p98 = scmp.eq.s32.totalorder %s18, 1
      %p99 = scmp.ne.s32.totalorder %s94, %s96
      %p100 = scmp.eq.s32.totalorder %s18, 0
      %p101 = por %p99, %p100
      %p102 = scmp.ne.s32.totalorder %s94, %s96
      %p103 = scmp.eq.s32.totalorder %s23, 1
      %p104 = por %p102, %p103
      %p105 = scmp.ne.s32.totalorder %s96, %s97
      %p106 = scmp.eq.s32.totalorder %s23, 0
      %p107 = por %p105, %p106
      %p108 = scmp.ne.s32.totalorder %s96, %s97
      %p109 = scmp.eq.s32.totalorder %s24, 1
      %p110 = por %p108, %p109
      %p112 = scmp.ne.s32.totalorder %s97, %s111
      %p113 = scmp.eq.s32.totalorder %s24, 0
      %p114 = por %p112, %p113
      %s116 = sadd.s32 %s115, 1
      %p119 = scmp.eq.s32.totalorder %s18, 1
      %p120 = scmp.ne.s32.totalorder %s115, %s117
      %p121 = scmp.eq.s32.totalorder %s18, 0
      %p122 = por %p120, %p121
      %p123 = scmp.ne.s32.totalorder %s115, %s117
      %p124 = scmp.eq.s32.totalorder %s23, 1
      %p125 = por %p123, %p124
      %p126 = scmp.ne.s32.totalorder %s117, %s118
      %p127 = scmp.eq.s32.totalorder %s23, 0
      %p128 = por %p126, %p127
      %p129 = scmp.ne.s32.totalorder %s117, %s118
      %p130 = scmp.eq.s32.totalorder %s24, 1
      %p131 = por %p129, %p130
      %p133 = scmp.ne.s32.totalorder %s118, %s132
      %p134 = scmp.eq.s32.totalorder %s24, 0
      %p135 = por %p133, %p134
      %s136 = ssub.s32 %s18, %s25
      %p137 = scmp.eq.s32.totalorder %s136, 0
      %s139 = sadd.s32 %s138, 1
      %s140 = scalar_select %p137, %s138, %s139
      %p143 = pneg %p137
      %p144 = scmp.eq.s32.totalorder %s18, 1
      %p145 = por %p143, %p144
      %p146 = scmp.ne.s32.totalorder %s138, %s141
      %p147 = scmp.eq.s32.totalorder %s18, 0
      %p148 = por %p146, %p147
      %p149 = scmp.ne.s32.totalorder %s138, %s141
      %p150 = scmp.eq.s32.totalorder %s23, 1
      %p151 = por %p149, %p150
      %p152 = scmp.ne.s32.totalorder %s141, %s142
      %p153 = scmp.eq.s32.totalorder %s23, 0
      %p154 = por %p152, %p153
      %p155 = scmp.ne.s32.totalorder %s141, %s142
      %p156 = scmp.eq.s32.totalorder %s24, 1
      %p157 = por %p155, %p156
      %p159 = scmp.ne.s32.totalorder %s142, %s158
      %p160 = scmp.eq.s32.totalorder %s24, 0
      %p161 = por %p159, %p160
      %p162 = scmp.le.s32.totalorder 1, %s18
      %p163 = scmp.lt.s32.totalorder %s18, 3
      %p164 = pnand %p162, %p163
      %p165 = pneg %p164
      // Predicated region
      $region9: #{tpu_custom_call.1} parent=5 // pred_check
        _
      $region10: #{tpu_custom_call.1} parent=5 // pred_check_branch
        %167 = sbr.rel (%p164) target = $region12
      $region11: #{tpu_custom_call.1} parent=5 // pred_region
        %s168 = ssub.s32 %s18, 1
        // Predicated region
        $region13: #{tpu_custom_call.1} parent=11 // pred_check
          %p169 = pneg %p65
        $region14: #{tpu_custom_call.1} parent=11 // pred_check_branch
          %171 = sbr.rel (%p169) target = $region16
        $region15: #{tpu_custom_call.1} parent=11 // pred_region
          %s173 = ssub.s32 256, 256
          %174 = vsyncadd [#allocation6], %s173
          %s175 = sshll.u32 [#allocation5], 4
          %s176 = int_to_ptr.vmem [resolvable:$true] %s175
          %181 = dma.hbm_to_vmem [thread:$0]  %s1, 256, %s176, [#allocation6], 64, 64, 4
        $region16: #{tpu_custom_call.1} parent=11 // pred_fallthru
          _
        // Predicated region
        $region17: #{tpu_custom_call.1} parent=11 // pred_check
          %p182 = pneg %p86
        $region18: #{tpu_custom_call.1} parent=11 // pred_check_branch
          %184 = sbr.rel (%p182) target = $region20
        $region19: #{tpu_custom_call.1} parent=11 // pred_region
          _
        $region20: #{tpu_custom_call.1} parent=11 // pred_fallthru
          _
        // Predicated region
        $region21: #{tpu_custom_call.1} parent=11 // pred_check
          %p185 = pneg %p107
        $region22: #{tpu_custom_call.1} parent=11 // pred_check_branch
          %187 = sbr.rel (%p185) target = $region24
        $region23: #{tpu_custom_call.1} parent=11 // pred_region
          %s189 = ssub.s32 256, 256
          %190 = vsyncadd [#allocation6], %s189
          %s191 = sshll.u32 [#allocation7], 4
          %s192 = int_to_ptr.vmem [resolvable:$true] %s191
          %197 = dma.hbm_to_vmem [thread:$0]  %s3, 256, %s192, [#allocation6], 64, 64, 4
        $region24: #{tpu_custom_call.1} parent=11 // pred_fallthru
          _
        // Predicated region
        $region25: #{tpu_custom_call.1} parent=11 // pred_check
          %p198 = pneg %p128
        $region26: #{tpu_custom_call.1} parent=11 // pred_check_branch
          %200 = sbr.rel (%p198) target = $region28
        $region27: #{tpu_custom_call.1} parent=11 // pred_region
          _
        $region28: #{tpu_custom_call.1} parent=11 // pred_fallthru
          _
      $region12: #{tpu_custom_call.1} parent=5 // pred_fallthru
        _
      %p201 = scmp.lt.s32.totalorder %s18, 2
      // Predicated region
      $region29: #{tpu_custom_call.1} parent=5 // pred_check
        %p202 = pneg %p201
      $region30: #{tpu_custom_call.1} parent=5 // pred_check_branch
        %204 = sbr.rel (%p202) target = $region32
      $region31: #{tpu_custom_call.1} parent=5 // pred_region
        // Predicated region
        $region33: #{tpu_custom_call.1} parent=31 // pred_check
          %p205 = pneg %p38
        $region34: #{tpu_custom_call.1} parent=31 // pred_check_branch
          %207 = sbr.rel (%p205) target = $region36
        $region35: #{tpu_custom_call.1} parent=31 // pred_region
          %s208 = sand.u32 %s28, 1
          %s209 = scalar_lea.sflag [#allocation3], %s208
          %s210 = sand.u32 %s28, 1
          %s211 = smul.addr %s210, 4
          %s212 = scalar_lea.vmem [#allocation2], %s211
          %s214 = ssub.s32 64, 64
          %215 = vsyncadd %s209, %s214
          %s216 = smul.addr %s18, 64
          %s217 = scalar_lea.hbm %s0, %s216
          %s219 = sshll.u32 %s212, 4
          %s220 = int_to_ptr.vmem [resolvable:$true] %s219
          %222 = dma.hbm_to_vmem [thread:$0]  %s217, 64, %s220, %s209
        $region36: #{tpu_custom_call.1} parent=31 // pred_fallthru
          _
      $region32: #{tpu_custom_call.1} parent=5 // pred_fallthru
        _
      %p223 = scmp.le.s32.totalorder 1, %s18
      %p224 = scmp.lt.s32.totalorder %s18, 3
      %p225 = pnand %p223, %p224
      %p226 = pneg %p225
      // Predicated region
      $region37: #{tpu_custom_call.1} parent=5 // pred_check
        _
      $region38: #{tpu_custom_call.1} parent=5 // pred_check_branch
        %228 = sbr.rel (%p225) target = $region40
      $region39: #{tpu_custom_call.1} parent=5 // pred_region
        %s229 = ssub.s32 %s18, 1
        %s230 = sand.u32 %s31, 1
        %s231 = scalar_lea.sflag [#allocation3], %s230
        %s232 = sand.u32 %s31, 1
        %s233 = smul.addr %s232, 4
        %s234 = scalar_lea.vmem [#allocation2], %s233
        // Predicated region
        $region41: #{tpu_custom_call.1} parent=39 // pred_check
          %p235 = pneg %p44
        $region42: #{tpu_custom_call.1} parent=39 // pred_check_branch
          %237 = sbr.rel (%p235) target = $region44
        $region43: #{tpu_custom_call.1} parent=39 // pred_region
          %238 = dma.done %s231, 64
        $region44: #{tpu_custom_call.1} parent=39 // pred_fallthru
          _
        // Predicated region
        $region45: #{tpu_custom_call.1} parent=39 // pred_check
          %p239 = pneg %p65
        $region46: #{tpu_custom_call.1} parent=39 // pred_check_branch
          %241 = sbr.rel (%p239) target = $region48
        $region47: #{tpu_custom_call.1} parent=39 // pred_region
          %242 = dma.done [#allocation6], 256
        $region48: #{tpu_custom_call.1} parent=39 // pred_fallthru
          _
        // Predicated region
        $region49: #{tpu_custom_call.1} parent=39 // pred_check
          %p243 = pneg %p107
        $region50: #{tpu_custom_call.1} parent=39 // pred_check_branch
          %245 = sbr.rel (%p243) target = $region52
        $region51: #{tpu_custom_call.1} parent=39 // pred_region
          %246 = dma.done [#allocation6], 256
        $region52: #{tpu_custom_call.1} parent=39 // pred_fallthru
          _
        %s247 = sand.u32 %s31, 1
        %s248 = scalar_lea.sflag [#allocation3], %s247
        %s249 = sand.u32 %s31, 1
        %s250 = smul.addr %s249, 4
        %s251 = scalar_lea.vmem [#allocation2], %s250
        %p252 = pneg %p44
        %p253 = pneg %p41
        %p254 = pneg %p65
        %p255 = pneg %p62
        %p256 = pneg %p86
        %p257 = pneg %p83
        %p258 = pneg %p107
        %p259 = pneg %p104
        %p260 = pneg %p128
        %p261 = pneg %p125
        %p262 = pneg %p154
        %p263 = pneg %p151
        %s264 = sand.u32 %s141, 1
        %s265 = scalar_lea.sflag [#allocation4], %s264
        %s266 = sand.u32 %s141, 1
        %s267 = smul.addr %s266, 8
        %s268 = scalar_lea.vmem [#allocation8], %s267
        %v270 = vld [vmem:[%s234] sm:$0xf]
        %v271 = vld [vmem:[#allocation5] sm:$0xf]
        %v272 = vld [vmem:[#allocation5 + $0x4] sm:$0xf]
        %v273 = vld [vmem:[#allocation5 + $0x8] sm:$0xf]
        %v274 = vld [vmem:[#allocation5 + $0xc] sm:$0x7]
        %v275 = vld [vmem:[%s2] sm:$0x1]
        %v277 = vlaneseq
        %v278 = vshrl.u32 %v277, 7
        %v279 = vsub.s32 0, %v278
        %v280 = vrot.slane %v275, %v279
        %v286 = vunpack.c.l.b16 %v271
        %v287 = vunpack.c.l.b16 %v272
        %v288 = vunpack.c.l.b16 %v273
        %v289 = vunpack.c.l.b16 %v274
        %v290 = vpack.c.b16 %v287, %v286
        %v291 = vpack.c.b16 %v289, %v288
        %vm293 = vcmask 244736
        %v295 = vsel %vm293, %v270, 0
        %vm297 = vcmask 1046528
        %v299 = vsel %vm297, %v291, 0
        %301 = vmatprep.subr.bf16.mxu0 0
        %302 = vmatpush1.bf16.msra.mxu0 0
        %303 = vmatprep.subr.bf16.mxu0 0
        %304 = vmatpush1.bf16.msra.mxu0 0
        %305 = vmatprep.subr.bf16.mxu0 0
        %306 = vmatpush1.bf16.msra.mxu0 0
        %307 = vmatprep.subr.bf16.mxu0 0
        %308 = vmatpush1.bf16.msra.mxu0 0
        %309 = vmatprep.subr.bf16.mxu0 0
        %310 = vmatpush1.bf16.msra.mxu0 0
        %311 = vmatprep.subr.bf16.mxu0 0
        %312 = vmatpush1.bf16.msra.mxu0 0
        %313 = vmatprep.subr.bf16.mxu0 0
        %314 = vmatpush1.bf16.msra.mxu0 %v299
        %315 = vmatprep.subr.bf16.mxu0 0
        %316 = vmatpush1.bf16.msra.mxu0 %v290
        %317 = vmatprep.subr.bf16.mxu0 0
        %318 = vmatpush2.bf16.msra.mxu0 0
        %319 = vmatprep.subr.bf16.mxu0 0
        %320 = vmatpush2.bf16.msra.mxu0 0
        %321 = vmatprep.subr.bf16.mxu0 0
        %322 = vmatpush2.bf16.msra.mxu0 0
        %323 = vmatprep.subr.bf16.mxu0 0
        %324 = vmatpush2.bf16.msra.mxu0 0
        %325 = vmatprep.subr.bf16.mxu0 0
        %326 = vmatpush2.bf16.msra.mxu0 0
        %327 = vmatprep.subr.bf16.mxu0 0
        %328 = vmatpush2.bf16.msra.mxu0 0
        %329 = vmatprep.subr.bf16.mxu0 0
        %330 = vmatpush2.bf16.msra.mxu0 0
        %331 = vmatprep.subr.bf16.mxu0 0
        %332 = vmatpush2.bf16.msra.mxu0 0
        %333 = vmatprep.mubr.bf16.mxu0 0
        %334 = vmatmul.mubr.bf16.gmra.mxu0 %v295
        %v335 = vpop.f32.mrf.mxu0
        %v336 = vadd.f32 %v280, %v335
        %v337 = vpop.f32.mrf.mxu0
        %v338 = vpop.f32.mrf.mxu0
        %v339 = vpop.f32.mrf.mxu0
        %340 = vdwg.mxu0
        %v341 = vpack.c.bf16 %v336, %v336
        %343 = vrot.lane.b32.xlu0 %v341, 96
        %v344 = vpop.permute.xlu0 %343
        %vm345 = vcmask 64512
        %v347 = vsel %vm345, %v341, 0
        %v350 = vsel %vm345, %v344, 0
        %352 = vmatprep.subr.bf16.mxu0 0
        %353 = vmatpush1.bf16.xpose.msra.mxu0 0
        %354 = vmatprep.subr.bf16.mxu0 0
        %355 = vmatpush1.bf16.xpose.msra.mxu0 0
        %356 = vmatprep.subr.bf16.mxu0 0
        %357 = vmatpush1.bf16.xpose.msra.mxu0 0
        %358 = vmatprep.subr.bf16.mxu0 0
        %359 = vmatpush1.bf16.xpose.msra.mxu0 0
        %360 = vmatprep.subr.bf16.mxu0 0
        %361 = vmatpush1.bf16.xpose.msra.mxu0 0
        %362 = vmatprep.subr.bf16.mxu0 0
        %363 = vmatpush1.bf16.xpose.msra.mxu0 0
        %364 = vmatprep.subr.bf16.mxu0 0
        %365 = vmatpush1.bf16.xpose.msra.mxu0 0
        %366 = vmatprep.subr.bf16.mxu0 0
        %367 = vmatpush1.bf16.xpose.msra.mxu0 %v350
        %368 = vmatprep.subr.bf16.mxu0 0
        %369 = vmatpush2.bf16.xpose.msra.mxu0 0
        %370 = vmatprep.subr.bf16.mxu0 0
        %371 = vmatpush2.bf16.xpose.msra.mxu0 0
        %372 = vmatprep.subr.bf16.mxu0 0
        %373 = vmatpush2.bf16.xpose.msra.mxu0 0
        %374 = vmatprep.subr.bf16.mxu0 0
        %375 = vmatpush2.bf16.xpose.msra.mxu0 0
        %376 = vmatprep.subr.bf16.mxu0 0
        %377 = vmatpush2.bf16.xpose.msra.mxu0 0
        %378 = vmatprep.subr.bf16.mxu0 0
        %379 = vmatpush2.bf16.xpose.msra.mxu0 0
        %380 = vmatprep.subr.bf16.mxu0 0
        %381 = vmatpush2.bf16.xpose.msra.mxu0 0
        %382 = vmatprep.subr.bf16.mxu0 0
        %383 = vmatpush2.bf16.xpose.msra.mxu0 0
        %384 = vmatprep.mubr.bf16.mxu0 0
        %385 = vmatmul.mubr.bf16.gmra.mxu0 %v347
        %v386 = vpop.f32.mrf.mxu0
        %v387 = vadd.f32 0.0, %v386
        %v388 = vpop.f32.mrf.mxu0
        %v389 = vpop.f32.mrf.mxu0
        %v390 = vpop.f32.mrf.mxu0
        %391 = vdwg.mxu0
        %v392 = vsel %vm345, %v387, -inf
        %393 = vmax.xlane.f32.xlu0 %v392
        %v394 = vpop.xlane.xlu0 %393
        %v395 = vsub.f32 %v387, %v394
        %v396 = vmul.f32 %v395, 1.442695
        %v397 = vpow.pop %v396
        %v398 = vsel %vm345, %v397, 0.0
        %399 = vadd.xlane.f32.xlu0 %v398
        %v400 = vpop.xlane.xlu0 %399
        %v401 = vrcp.pop %v400
        %v402 = vmul.f32 %v397, %v401
        %v403 = vpack.c.bf16 %v402, %v402
        %404 = vrot.lane.b32.xlu0 %v341, 64
        %v405 = vpop.permute.xlu0 %404
        %v407 = vsel %vm345, %v403, 0
        %vm409 = vcmask 1043456
        %v411 = vsel %vm409, %v405, 0
        %413 = vmatprep.subr.bf16.mxu0 0
        %414 = vmatpush1.bf16.msra.mxu0 0
        %415 = vmatprep.subr.bf16.mxu0 0
        %416 = vmatpush1.bf16.msra.mxu0 0
        %417 = vmatprep.subr.bf16.mxu0 0
        %418 = vmatpush1.bf16.msra.mxu0 0
        %419 = vmatprep.subr.bf16.mxu0 0
        %420 = vmatpush1.bf16.msra.mxu0 0
        %421 = vmatprep.subr.bf16.mxu0 0
        %422 = vmatpush1.bf16.msra.mxu0 0
        %423 = vmatprep.subr.bf16.mxu0 0
        %424 = vmatpush1.bf16.msra.mxu0 0
        %425 = vmatprep.subr.bf16.mxu0 0
        %426 = vmatpush1.bf16.msra.mxu0 0
        %427 = vmatprep.subr.bf16.mxu0 0
        %428 = vmatpush1.bf16.msra.mxu0 %v411
        %429 = vmatprep.subr.bf16.mxu0 0
        %430 = vmatpush2.bf16.msra.mxu0 0
        %431 = vmatprep.subr.bf16.mxu0 0
        %432 = vmatpush2.bf16.msra.mxu0 0
        %433 = vmatprep.subr.bf16.mxu0 0
        %434 = vmatpush2.bf16.msra.mxu0 0
        %435 = vmatprep.subr.bf16.mxu0 0
        %436 = vmatpush2.bf16.msra.mxu0 0
        %437 = vmatprep.subr.bf16.mxu0 0
        %438 = vmatpush2.bf16.msra.mxu0 0
        %439 = vmatprep.subr.bf16.mxu0 0
        %440 = vmatpush2.bf16.msra.mxu0 0
        %441 = vmatprep.subr.bf16.mxu0 0
        %442 = vmatpush2.bf16.msra.mxu0 0
        %443 = vmatprep.subr.bf16.mxu0 0
        %444 = vmatpush2.bf16.msra.mxu0 0
        %445 = vmatprep.mubr.bf16.mxu0 0
        %446 = vmatmul.mubr.bf16.gmra.mxu0 %v407
        %v447 = vpop.f32.mrf.mxu0
        %v448 = vadd.f32 0.0, %v447
        %v449 = vpop.f32.mrf.mxu0
        %v450 = vpop.f32.mrf.mxu0
        %v451 = vpop.f32.mrf.mxu0
        %452 = vdwg.mxu0
        %453 = vrot.lane.b32.xlu0 %v341, 120
        %v454 = vpop.permute.xlu0 %453
        %455 = vrot.lane.b32.xlu0 %v341, 88
        %v456 = vpop.permute.xlu0 %455
        %v458 = vsel %vm345, %v454, 0
        %v461 = vsel %vm345, %v456, 0
        %463 = vmatprep.subr.bf16.mxu0 0
        %464 = vmatpush1.bf16.xpose.msra.mxu0 0
        %465 = vmatprep.subr.bf16.mxu0 0
        %466 = vmatpush1.bf16.xpose.msra.mxu0 0
        %467 = vmatprep.subr.bf16.mxu0 0
        %468 = vmatpush1.bf16.xpose.msra.mxu0 0
        %469 = vmatprep.subr.bf16.mxu0 0
        %470 = vmatpush1.bf16.xpose.msra.mxu0 0
        %471 = vmatprep.subr.bf16.mxu0 0
        %472 = vmatpush1.bf16.xpose.msra.mxu0 0
        %473 = vmatprep.subr.bf16.mxu0 0
        %474 = vmatpush1.bf16.xpose.msra.mxu0 0
        %475 = vmatprep.subr.bf16.mxu0 0
        %476 = vmatpush1.bf16.xpose.msra.mxu0 0
        %477 = vmatprep.subr.bf16.mxu0 0
        %478 = vmatpush1.bf16.xpose.msra.mxu0 %v461
        %479 = vmatprep.subr.bf16.mxu0 0
        %480 = vmatpush2.bf16.xpose.msra.mxu0 0
        %481 = vmatprep.subr.bf16.mxu0 0
        %482 = vmatpush2.bf16.xpose.msra.mxu0 0
        %483 = vmatprep.subr.bf16.mxu0 0
        %484 = vmatpush2.bf16.xpose.msra.mxu0 0
        %485 = vmatprep.subr.bf16.mxu0 0
        %486 = vmatpush2.bf16.xpose.msra.mxu0 0
        %487 = vmatprep.subr.bf16.mxu0 0
        %488 = vmatpush2.bf16.xpose.msra.mxu0 0
        %489 = vmatprep.subr.bf16.mxu0 0
        %490 = vmatpush2.bf16.xpose.msra.mxu0 0
        %491 = vmatprep.subr.bf16.mxu0 0
        %492 = vmatpush2.bf16.xpose.msra.mxu0 0
        %493 = vmatprep.subr.bf16.mxu0 0
        %494 = vmatpush2.bf16.xpose.msra.mxu0 0
        %495 = vmatprep.mubr.bf16.mxu0 0
        %496 = vmatmul.mubr.bf16.gmra.mxu0 %v458
        %v497 = vpop.f32.mrf.mxu0
        %v498 = vadd.f32 0.0, %v497
        %v499 = vpop.f32.mrf.mxu0
        %v500 = vpop.f32.mrf.mxu0
        %v501 = vpop.f32.mrf.mxu0
        %502 = vdwg.mxu0
        %v503 = vsel %vm345, %v498, -inf
        %504 = vmax.xlane.f32.xlu0 %v503
        %v505 = vpop.xlane.xlu0 %504
        %v506 = vsub.f32 %v498, %v505
        %v507 = vmul.f32 %v506, 1.442695
        %v508 = vpow.pop %v507
        %v509 = vsel %vm345, %v508, 0.0
        %510 = vadd.xlane.f32.xlu0 %v509
        %v511 = vpop.xlane.xlu0 %510
        %v512 = vrcp.pop %v511
        %v513 = vmul.f32 %v508, %v512
        %v514 = vpack.c.bf16 %v513, %v513
        %515 = vrot.lane.b32.xlu0 %v341, 56
        %v516 = vpop.permute.xlu0 %515
        %v518 = vsel %vm345, %v514, 0
        %v521 = vsel %vm409, %v516, 0
        %523 = vmatprep.subr.bf16.mxu0 0
        %524 = vmatpush1.bf16.msra.mxu0 0
        %525 = vmatprep.subr.bf16.mxu0 0
        %526 = vmatpush1.bf16.msra.mxu0 0
        %527 = vmatprep.subr.bf16.mxu0 0
        %528 = vmatpush1.bf16.msra.mxu0 0
        %529 = vmatprep.subr.bf16.mxu0 0
        %530 = vmatpush1.bf16.msra.mxu0 0
        %531 = vmatprep.subr.bf16.mxu0 0
        %532 = vmatpush1.bf16.msra.mxu0 0
        %533 = vmatprep.subr.bf16.mxu0 0
        %534 = vmatpush1.bf16.msra.mxu0 0
        %535 = vmatprep.subr.bf16.mxu0 0
        %536 = vmatpush1.bf16.msra.mxu0 0
        %537 = vmatprep.subr.bf16.mxu0 0
        %538 = vmatpush1.bf16.msra.mxu0 %v521
        %539 = vmatprep.subr.bf16.mxu0 0
        %540 = vmatpush2.bf16.msra.mxu0 0
        %541 = vmatprep.subr.bf16.mxu0 0
        %542 = vmatpush2.bf16.msra.mxu0 0
        %543 = vmatprep.subr.bf16.mxu0 0
        %544 = vmatpush2.bf16.msra.mxu0 0
        %545 = vmatprep.subr.bf16.mxu0 0
        %546 = vmatpush2.bf16.msra.mxu0 0
        %547 = vmatprep.subr.bf16.mxu0 0
        %548 = vmatpush2.bf16.msra.mxu0 0
        %549 = vmatprep.subr.bf16.mxu0 0
        %550 = vmatpush2.bf16.msra.mxu0 0
        %551 = vmatprep.subr.bf16.mxu0 0
        %552 = vmatpush2.bf16.msra.mxu0 0
        %553 = vmatprep.subr.bf16.mxu0 0
        %554 = vmatpush2.bf16.msra.mxu0 0
        %555 = vmatprep.mubr.bf16.mxu0 0
        %556 = vmatmul.mubr.bf16.gmra.mxu0 %v518
        %v557 = vpop.f32.mrf.mxu0
        %v558 = vadd.f32 0.0, %v557
        %v559 = vpop.f32.mrf.mxu0
        %v560 = vpop.f32.mrf.mxu0
        %v561 = vpop.f32.mrf.mxu0
        %562 = vdwg.mxu0
        %563 = vrot.lane.b32.xlu0 %v341, 112
        %v564 = vpop.permute.xlu0 %563
        %565 = vrot.lane.b32.xlu0 %v341, 80
        %v566 = vpop.permute.xlu0 %565
        %v568 = vsel %vm345, %v564, 0
        %v571 = vsel %vm345, %v566, 0
        %573 = vmatprep.subr.bf16.mxu0 0
        %574 = vmatpush1.bf16.xpose.msra.mxu0 0
        %575 = vmatprep.subr.bf16.mxu0 0
        %576 = vmatpush1.bf16.xpose.msra.mxu0 0
        %577 = vmatprep.subr.bf16.mxu0 0
        %578 = vmatpush1.bf16.xpose.msra.mxu0 0
        %579 = vmatprep.subr.bf16.mxu0 0
        %580 = vmatpush1.bf16.xpose.msra.mxu0 0
        %581 = vmatprep.subr.bf16.mxu0 0
        %582 = vmatpush1.bf16.xpose.msra.mxu0 0
        %583 = vmatprep.subr.bf16.mxu0 0
        %584 = vmatpush1.bf16.xpose.msra.mxu0 0
        %585 = vmatprep.subr.bf16.mxu0 0
        %586 = vmatpush1.bf16.xpose.msra.mxu0 0
        %587 = vmatprep.subr.bf16.mxu0 0
        %588 = vmatpush1.bf16.xpose.msra.mxu0 %v571
        %589 = vmatprep.subr.bf16.mxu0 0
        %590 = vmatpush2.bf16.xpose.msra.mxu0 0
        %591 = vmatprep.subr.bf16.mxu0 0
        %592 = vmatpush2.bf16.xpose.msra.mxu0 0
        %593 = vmatprep.subr.bf16.mxu0 0
        %594 = vmatpush2.bf16.xpose.msra.mxu0 0
        %595 = vmatprep.subr.bf16.mxu0 0
        %596 = vmatpush2.bf16.xpose.msra.mxu0 0
        %597 = vmatprep.subr.bf16.mxu0 0
        %598 = vmatpush2.bf16.xpose.msra.mxu0 0
        %599 = vmatprep.subr.bf16.mxu0 0
        %600 = vmatpush2.bf16.xpose.msra.mxu0 0
        %601 = vmatprep.subr.bf16.mxu0 0
        %602 = vmatpush2.bf16.xpose.msra.mxu0 0
        %603 = vmatprep.subr.bf16.mxu0 0
        %604 = vmatpush2.bf16.xpose.msra.mxu0 0
        %605 = vmatprep.mubr.bf16.mxu0 0
        %606 = vmatmul.mubr.bf16.gmra.mxu0 %v568
        %v607 = vpop.f32.mrf.mxu0
        %v608 = vadd.f32 0.0, %v607
        %v609 = vpop.f32.mrf.mxu0
        %v610 = vpop.f32.mrf.mxu0
        %v611 = vpop.f32.mrf.mxu0
        %612 = vdwg.mxu0
        %v613 = vsel %vm345, %v608, -inf
        %614 = vmax.xlane.f32.xlu0 %v613
        %v615 = vpop.xlane.xlu0 %614
        %v616 = vsub.f32 %v608, %v615
        %v617 = vmul.f32 %v616, 1.442695
        %v618 = vpow.pop %v617
        %v619 = vsel %vm345, %v618, 0.0
        %620 = vadd.xlane.f32.xlu0 %v619
        %v621 = vpop.xlane.xlu0 %620
        %v622 = vrcp.pop %v621
        %v623 = vmul.f32 %v618, %v622
        %v624 = vpack.c.bf16 %v623, %v623
        %625 = vrot.lane.b32.xlu0 %v341, 48
        %v626 = vpop.permute.xlu0 %625
        %v628 = vsel %vm345, %v624, 0
        %v631 = vsel %vm409, %v626, 0
        %633 = vmatprep.subr.bf16.mxu0 0
        %634 = vmatpush1.bf16.msra.mxu0 0
        %635 = vmatprep.subr.bf16.mxu0 0
        %636 = vmatpush1.bf16.msra.mxu0 0
        %637 = vmatprep.subr.bf16.mxu0 0
        %638 = vmatpush1.bf16.msra.mxu0 0
        %639 = vmatprep.subr.bf16.mxu0 0
        %640 = vmatpush1.bf16.msra.mxu0 0
        %641 = vmatprep.subr.bf16.mxu0 0
        %642 = vmatpush1.bf16.msra.mxu0 0
        %643 = vmatprep.subr.bf16.mxu0 0
        %644 = vmatpush1.bf16.msra.mxu0 0
        %645 = vmatprep.subr.bf16.mxu0 0
        %646 = vmatpush1.bf16.msra.mxu0 0
        %647 = vmatprep.subr.bf16.mxu0 0
        %648 = vmatpush1.bf16.msra.mxu0 %v631
        %649 = vmatprep.subr.bf16.mxu0 0
        %650 = vmatpush2.bf16.msra.mxu0 0
        %651 = vmatprep.subr.bf16.mxu0 0
        %652 = vmatpush2.bf16.msra.mxu0 0
        %653 = vmatprep.subr.bf16.mxu0 0
        %654 = vmatpush2.bf16.msra.mxu0 0
        %655 = vmatprep.subr.bf16.mxu0 0
        %656 = vmatpush2.bf16.msra.mxu0 0
        %657 = vmatprep.subr.bf16.mxu0 0
        %658 = vmatpush2.bf16.msra.mxu0 0
        %659 = vmatprep.subr.bf16.mxu0 0
        %660 = vmatpush2.bf16.msra.mxu0 0
        %661 = vmatprep.subr.bf16.mxu0 0
        %662 = vmatpush2.bf16.msra.mxu0 0
        %663 = vmatprep.subr.bf16.mxu0 0
        %664 = vmatpush2.bf16.msra.mxu0 0
        %665 = vmatprep.mubr.bf16.mxu0 0
        %666 = vmatmul.mubr.bf16.gmra.mxu0 %v628
        %v667 = vpop.f32.mrf.mxu0
        %v668 = vadd.f32 0.0, %v667
        %v669 = vpop.f32.mrf.mxu0
        %v670 = vpop.f32.mrf.mxu0
        %v671 = vpop.f32.mrf.mxu0
        %672 = vdwg.mxu0
        %673 = vrot.lane.b32.xlu0 %v341, 104
        %v674 = vpop.permute.xlu0 %673
        %675 = vrot.lane.b32.xlu0 %v341, 72
        %v676 = vpop.permute.xlu0 %675
        %v678 = vsel %vm345, %v674, 0
        %v681 = vsel %vm345, %v676, 0
        %683 = vmatprep.subr.bf16.mxu0 0
        %684 = vmatpush1.bf16.xpose.msra.mxu0 0
        %685 = vmatprep.subr.bf16.mxu0 0
        %686 = vmatpush1.bf16.xpose.msra.mxu0 0
        %687 = vmatprep.subr.bf16.mxu0 0
        %688 = vmatpush1.bf16.xpose.msra.mxu0 0
        %689 = vmatprep.subr.bf16.mxu0 0
        %690 = vmatpush1.bf16.xpose.msra.mxu0 0
        %691 = vmatprep.subr.bf16.mxu0 0
        %692 = vmatpush1.bf16.xpose.msra.mxu0 0
        %693 = vmatprep.subr.bf16.mxu0 0
        %694 = vmatpush1.bf16.xpose.msra.mxu0 0
        %695 = vmatprep.subr.bf16.mxu0 0
        %696 = vmatpush1.bf16.xpose.msra.mxu0 0
        %697 = vmatprep.subr.bf16.mxu0 0
        %698 = vmatpush1.bf16.xpose.msra.mxu0 %v681
        %699 = vmatprep.subr.bf16.mxu0 0
        %700 = vmatpush2.bf16.xpose.msra.mxu0 0
        %701 = vmatprep.subr.bf16.mxu0 0
        %702 = vmatpush2.bf16.xpose.msra.mxu0 0
        %703 = vmatprep.subr.bf16.mxu0 0
        %704 = vmatpush2.bf16.xpose.msra.mxu0 0
        %705 = vmatprep.subr.bf16.mxu0 0
        %706 = vmatpush2.bf16.xpose.msra.mxu0 0
        %707 = vmatprep.subr.bf16.mxu0 0
        %708 = vmatpush2.bf16.xpose.msra.mxu0 0
        %709 = vmatprep.subr.bf16.mxu0 0
        %710 = vmatpush2.bf16.xpose.msra.mxu0 0
        %711 = vmatprep.subr.bf16.mxu0 0
        %712 = vmatpush2.bf16.xpose.msra.mxu0 0
        %713 = vmatprep.subr.bf16.mxu0 0
        %714 = vmatpush2.bf16.xpose.msra.mxu0 0
        %715 = vmatprep.mubr.bf16.mxu0 0
        %716 = vmatmul.mubr.bf16.gmra.mxu0 %v678
        %v717 = vpop.f32.mrf.mxu0
        %v718 = vadd.f32 0.0, %v717
        %v719 = vpop.f32.mrf.mxu0
        %v720 = vpop.f32.mrf.mxu0
        %v721 = vpop.f32.mrf.mxu0
        %722 = vdwg.mxu0
        %v723 = vsel %vm345, %v718, -inf
        %724 = vmax.xlane.f32.xlu0 %v723
        %v725 = vpop.xlane.xlu0 %724
        %v726 = vsub.f32 %v718, %v725
        %v727 = vmul.f32 %v726, 1.442695
        %v728 = vpow.pop %v727
        %v729 = vsel %vm345, %v728, 0.0
        %730 = vadd.xlane.f32.xlu0 %v729
        %v731 = vpop.xlane.xlu0 %730
        %v732 = vrcp.pop %v731
        %v733 = vmul.f32 %v728, %v732
        %v734 = vpack.c.bf16 %v733, %v733
        %735 = vrot.lane.b32.xlu0 %v341, 40
        %v736 = vpop.permute.xlu0 %735
        %v738 = vsel %vm345, %v734, 0
        %v741 = vsel %vm409, %v736, 0
        %743 = vmatprep.subr.bf16.mxu0 0
        %744 = vmatpush1.bf16.msra.mxu0 0
        %745 = vmatprep.subr.bf16.mxu0 0
        %746 = vmatpush1.bf16.msra.mxu0 0
        %747 = vmatprep.subr.bf16.mxu0 0
        %748 = vmatpush1.bf16.msra.mxu0 0
        %749 = vmatprep.subr.bf16.mxu0 0
        %750 = vmatpush1.bf16.msra.mxu0 0
        %751 = vmatprep.subr.bf16.mxu0 0
        %752 = vmatpush1.bf16.msra.mxu0 0
        %753 = vmatprep.subr.bf16.mxu0 0
        %754 = vmatpush1.bf16.msra.mxu0 0
        %755 = vmatprep.subr.bf16.mxu0 0
        %756 = vmatpush1.bf16.msra.mxu0 0
        %757 = vmatprep.subr.bf16.mxu0 0
        %758 = vmatpush1.bf16.msra.mxu0 %v741
        %759 = vmatprep.subr.bf16.mxu0 0
        %760 = vmatpush2.bf16.msra.mxu0 0
        %761 = vmatprep.subr.bf16.mxu0 0
        %762 = vmatpush2.bf16.msra.mxu0 0
        %763 = vmatprep.subr.bf16.mxu0 0
        %764 = vmatpush2.bf16.msra.mxu0 0
        %765 = vmatprep.subr.bf16.mxu0 0
        %766 = vmatpush2.bf16.msra.mxu0 0
        %767 = vmatprep.subr.bf16.mxu0 0
        %768 = vmatpush2.bf16.msra.mxu0 0
        %769 = vmatprep.subr.bf16.mxu0 0
        %770 = vmatpush2.bf16.msra.mxu0 0
        %771 = vmatprep.subr.bf16.mxu0 0
        %772 = vmatpush2.bf16.msra.mxu0 0
        %773 = vmatprep.subr.bf16.mxu0 0
        %774 = vmatpush2.bf16.msra.mxu0 0
        %775 = vmatprep.mubr.bf16.mxu0 0
        %776 = vmatmul.mubr.bf16.gmra.mxu0 %v738
        %v777 = vpop.f32.mrf.mxu0
        %v778 = vadd.f32 0.0, %v777
        %v779 = vpop.f32.mrf.mxu0
        %v780 = vpop.f32.mrf.mxu0
        %v781 = vpop.f32.mrf.mxu0
        %782 = vdwg.mxu0
        %784 = vrot.lane.b32.xlu0 %v558, 8
        %v785 = vpop.permute.xlu0 %784
        %788 = vrot.lane.b32.xlu0 %v668, 16
        %v789 = vpop.permute.xlu0 %788
        %792 = vrot.lane.b32.xlu0 %v778, 24
        %v793 = vpop.permute.xlu0 %792
        %v795 = vsel %vm345, %v448, %v785
        %vm796 = vcmask 130048
        %v797 = vsel %vm796, %v795, %v789
        %vm798 = vcmask 195584
        %v799 = vsel %vm798, %v797, %v793
        %v800 = vpack.c.bf16 %v799, %v799
        %v801 = vld [vmem:[#allocation7] sm:$0xf]
        %v802 = vld [vmem:[#allocation7 + $0x4] sm:$0xf]
        %v803 = vld [vmem:[#allocation7 + $0x8] sm:$0xf]
        %v804 = vld [vmem:[#allocation7 + $0xc] sm:$0xf]
        %v805 = vld [vmem:[%s4] sm:$0x1]
        %v807 = vlaneseq
        %v808 = vshrl.u32 %v807, 7
        %v809 = vsub.s32 0, %v808
        %v810 = vrot.slane %v805, %v809
        %v816 = vunpack.c.l.b16 %v801
        %v817 = vunpack.c.l.b16 %v802
        %v818 = vunpack.c.l.b16 %v803
        %v819 = vunpack.c.l.b16 %v804
        %v820 = vpack.c.b16 %v817, %v816
        %v821 = vpack.c.b16 %v819, %v818
        %vm824 = vcmask 261120
        %v826 = vsel %vm824, %v800, 0
        %828 = vmatprep.subr.bf16.mxu0 0
        %829 = vmatpush1.bf16.msra.mxu0 0
        %830 = vmatprep.subr.bf16.mxu0 0
        %831 = vmatpush1.bf16.msra.mxu0 0
        %832 = vmatprep.subr.bf16.mxu0 0
        %833 = vmatpush1.bf16.msra.mxu0 0
        %834 = vmatprep.subr.bf16.mxu0 0
        %835 = vmatpush1.bf16.msra.mxu0 0
        %836 = vmatprep.subr.bf16.mxu0 0
        %837 = vmatpush1.bf16.msra.mxu0 0
        %838 = vmatprep.subr.bf16.mxu0 0
        %839 = vmatpush1.bf16.msra.mxu0 0
        %840 = vmatprep.subr.bf16.mxu0 0
        %841 = vmatpush1.bf16.msra.mxu0 %v821
        %842 = vmatprep.subr.bf16.mxu0 0
        %843 = vmatpush1.bf16.msra.mxu0 %v820
        %844 = vmatprep.subr.bf16.mxu0 0
        %845 = vmatpush2.bf16.msra.mxu0 0
        %846 = vmatprep.subr.bf16.mxu0 0
        %847 = vmatpush2.bf16.msra.mxu0 0
        %848 = vmatprep.subr.bf16.mxu0 0
        %849 = vmatpush2.bf16.msra.mxu0 0
        %850 = vmatprep.subr.bf16.mxu0 0
        %851 = vmatpush2.bf16.msra.mxu0 0
        %852 = vmatprep.subr.bf16.mxu0 0
        %853 = vmatpush2.bf16.msra.mxu0 0
        %854 = vmatprep.subr.bf16.mxu0 0
        %855 = vmatpush2.bf16.msra.mxu0 0
        %856 = vmatprep.subr.bf16.mxu0 0
        %857 = vmatpush2.bf16.msra.mxu0 0
        %858 = vmatprep.subr.bf16.mxu0 0
        %859 = vmatpush2.bf16.msra.mxu0 0
        %860 = vmatprep.mubr.bf16.mxu0 0
        %861 = vmatmul.mubr.bf16.gmra.mxu0 %v826
        %v862 = vpop.f32.mrf.mxu0
        %v863 = vadd.f32 %v810, %v862
        %v864 = vpop.f32.mrf.mxu0
        %v865 = vpop.f32.mrf.mxu0
        %v866 = vpop.f32.mrf.mxu0
        %867 = vdwg.mxu0
        %868 = vst.msk [vmem:[%s268] sm:$0xff] %vm824, %v863
        %s869 = sand.u32 %s141, 1
        %s870 = scalar_lea.sflag [#allocation4], %s869
        %s871 = sand.u32 %s141, 1
        %s872 = smul.addr %s871, 8
        %s873 = scalar_lea.vmem [#allocation8], %s872
        // Predicated region
        $region53: #{tpu_custom_call.1} parent=39 // pred_check
          %p874 = pneg %p151
        $region54: #{tpu_custom_call.1} parent=39 // pred_check_branch
          %876 = sbr.rel (%p874) target = $region56
        $region55: #{tpu_custom_call.1} parent=39 // pred_region
          %s878 = ssub.s32 128, 128
          %879 = vsyncadd %s870, %s878
          %s880 = smul.addr %s23, 128
          %s881 = scalar_lea.hbm %s5, %s880
          %s883 = sshll.u32 %s873, 4
          %s884 = int_to_ptr.vmem [resolvable:$true] %s883
          %886 = dma.vmem_to_hbm [thread:$0]  %s884, 128, %s881, %s870
        $region56: #{tpu_custom_call.1} parent=39 // pred_fallthru
          _
      $region40: #{tpu_custom_call.1} parent=5 // pred_fallthru
        _
      %p887 = scmp.le.s32.totalorder 2, %s18
      // Predicated region
      $region57: #{tpu_custom_call.1} parent=5 // pred_check
        %p888 = pneg %p887
      $region58: #{tpu_custom_call.1} parent=5 // pred_check_branch
        %890 = sbr.rel (%p888) target = $region60
      $region59: #{tpu_custom_call.1} parent=5 // pred_region
        %s891 = ssub.s32 %s18, 2
        // Predicated region
        $region61: #{tpu_custom_call.1} parent=59 // pred_check
          %p892 = pneg %p157
        $region62: #{tpu_custom_call.1} parent=59 // pred_check_branch
          %894 = sbr.rel (%p892) target = $region64
        $region63: #{tpu_custom_call.1} parent=59 // pred_region
          %s895 = sand.u32 %s142, 1
          %s896 = scalar_lea.sflag [#allocation4], %s895
          %s897 = sand.u32 %s142, 1
          %s898 = smul.addr %s897, 8
          %s899 = scalar_lea.vmem [#allocation8], %s898
          %900 = dma.done %s896, 128
        $region64: #{tpu_custom_call.1} parent=59 // pred_fallthru
          _
      $region60: #{tpu_custom_call.1} parent=5 // pred_fallthru
        _
    $region6: #{tpu_custom_call.1} parent=1 // loop_footer
      %s22 = sadd.s32 1, %s18
    $region7: #{tpu_custom_call.1} parent=1 // loop_footer_branch
      %17 = sbr.rel target = $region3
    $region8: #{tpu_custom_call.1} parent=1 // loop_exit
      _
    %901 = vsyncpa [#allocation3], 1
    %s902 = scalar_lea.sflag [#allocation3], 1
    %903 = vsyncpa %s902, 1
    %904 = vsyncpa [#allocation6], 1
    %905 = vsyncpa [#allocation4], 1
    %s906 = scalar_lea.sflag [#allocation4], 1
    %907 = vsyncpa %s906, 1

</llo_original>
